<compile_context>
chip_gen: v6e
topology: v6e:2x2x1
jax: 0.10.0
libtpu: 0.0.40
codegen_flags: <defaults>
</compile_context>

<pallas_src>
import functools

import jax
import jax.numpy as jnp
from jax.experimental import pallas as pl
from jax.experimental.pallas import tpu as pltpu


def _round_up(x, m):
    return ((x + m - 1) // m) * m


def _decoder_mdp_kernel(s_ref, a_ref, z_ref, w_ref, aux_ref, out_ref, x_ref, *,
                        clip, reward_dim, k1, k1pad, off2, off3):
    """Fused state + reward decoder forward.

    w_ref : (Rw, L) bf16 packed weights
      rows [0:k1)          : concatenated W1 (cols [0:H) state tower, [H:2H) reward tower)
      rows [off2:off2+L)   : block-diag W2   (sw2 | rw2)
      rows [off3:off3+L)   : block-diag W3   (sw3 -> lanes [0:clip), rw3 -> lanes [clip:clip+H/2))
    aux_ref : (Ra, L) f32
      row 0/1/2 : fused biases b1 / b2 / b3
      row 3     : reward output bias rb4, placed at lanes [clip:clip+reward_dim)
      rows 4:4+reward_dim : W4^T rows, values at lanes [clip:clip+H/2)
    out_ref : (TB, out_w) f32 lane-dense merged [state_estimate | reward_estimate | 0...]
    x_ref   : (TB, k1pad) f32 VMEM scratch for the fused layer-1 LHS
    """
    f32, bf16 = jnp.float32, jnp.bfloat16
    lpad = w_ref.shape[1]
    tb = out_ref.shape[0]
    out_w = out_ref.shape[1]
    sd, ad, zd = s_ref.shape[1], a_ref.shape[1], z_ref.shape[1]

    # ---- assemble fused layer-1 LHS [state | action | z | 0-pad] (cheap VPU stores) ----
    x_ref[:, 0:sd] = s_ref[...].astype(f32)
    x_ref[:, sd:sd + ad] = a_ref[...].astype(f32)
    x_ref[:, sd + ad:sd + ad + zd] = z_ref[...].astype(f32)
    if k1pad > k1:  # static
        x_ref[:, k1:k1pad] = jnp.zeros((tb, k1pad - k1), f32)

    # ---- layer 1: ONE MXU pass against the packed [W1_state | W1_reward] block ----
    y = jnp.dot(x_ref[...].astype(bf16), w_ref[0:k1pad, :],
                preferred_element_type=f32)
    y = jnp.maximum(y + aux_ref[0:1, :], 0.0)                       # (tb, L) f32

    # ---- layer 2: block-diagonal, 128-lane-dense matmul ----
    y = jnp.dot(y.astype(bf16), w_ref[off2:off2 + lpad, :],
                preferred_element_type=f32)
    y = jnp.maximum(y + aux_ref[1:2, :], 0.0)

    # ---- layer 3: block-diagonal (state output | reward hidden pre-activation) ----
    y3 = jnp.dot(y.astype(bf16), w_ref[off3:off3 + lpad, :],
                 preferred_element_type=f32)
    y3 = y3 + aux_ref[2:3, :]                                       # (tb, L) f32

    # ---- reward head (VPU/XLU lane reduction) + lane-dense merged output ----
    # ReLU the whole row: lanes outside [clip:clip+H/2) carry zero W4^T weights,
    # so they contribute nothing to the reduction.
    g = jnp.maximum(y3, 0.0)
    lane = jax.lax.broadcasted_iota(jnp.int32, (tb, lpad), 1)
    merged = jnp.where(lane < clip, y3, 0.0)                        # state estimate
    for j in range(reward_dim):                                     # static, small
        rj = jnp.sum(g * aux_ref[4 + j:5 + j, :], axis=-1, keepdims=True)  # (tb, 1)
        merged = jnp.where(lane == clip + j, rj, merged)
    merged = merged + aux_ref[3:4, :]                               # rb4 at lanes [clip:clip+rd)

    # single full-width UNMASKED store (clean (8,128) writeback tile)
    out_ref[...] = merged if out_w == lpad else merged[:, 0:out_w]


class DecoderMDPPallas:
    def __init__(self, action_dim, state_dim, reward_dim, z_dim, net_complex,
                 state_reconstruction_clip, key):
        self.state_dim = state_dim
        self.action_dim = action_dim
        self.z_dim = z_dim
        self.reward_dim = reward_dim
        self.input_size = state_dim + action_dim + z_dim
        self.hidden = int(self.input_size * net_complex)
        if (state_reconstruction_clip is not None
                and 0 < state_reconstruction_clip < state_dim):
            self.clip = state_reconstruction_clip
        else:
            self.clip = state_dim

        D, H = self.input_size, self.hidden
        H2 = H // 2

        def init_linear(k, fan_in, fan_out):
            kw, kb = jax.random.split(k)
            bound = fan_in ** -0.5
            w = jax.random.uniform(kw, (fan_in, fan_out), jnp.float32, -bound, bound)
            b = jax.random.uniform(kb, (fan_out,), jnp.float32, -bound, bound)
            return w, b

        ks = jax.random.split(key, 7)
        # state decoder: D -> H -> H -> clip
        self.sw1, self.sb1 = init_linear(ks[0], D, H)
        self.sw2, self.sb2 = init_linear(ks[1], H, H)
        self.sw3, self.sb3 = init_linear(ks[2], H, self.clip)
        # reward decoder: D -> H -> H -> H//2 -> reward_dim
        self.rw1, self.rb1 = init_linear(ks[3], D, H)
        self.rw2, self.rb2 = init_linear(ks[4], H, H)
        self.rw3, self.rb3 = init_linear(ks[5], H, H2)
        self.rw4, self.rb4 = init_linear(ks[6], H2, reward_dim)

        # ---- pack: one bf16 weight buffer + one f32 bias/aux buffer --------------
        # NOTE: padded rows/lanes must stay exactly zero (see module docstring).
        lpad = _round_up(max(2 * H, self.clip + H2, self.clip + reward_dim), 128)
        k1 = D
        k1pad = _round_up(D, 16)          # bf16 sublane-tile aligned K for layer 1
        off2 = k1pad
        off3 = off2 + lpad
        rw_rows = off3 + lpad

        wp = jnp.zeros((rw_rows, lpad), jnp.float32)
        # fused layer 1 (single K block): cols [0:H) state tower, [H:2H) reward tower
        wp = wp.at[0:D, 0:H].set(self.sw1)
        wp = wp.at[0:D, H:2 * H].set(self.rw1)
        # layer 2 block-diagonal
        wp = wp.at[off2:off2 + H, 0:H].set(self.sw2)
        wp = wp.at[off2 + H:off2 + 2 * H, H:2 * H].set(self.rw2)
        # layer 3 block-diagonal: state output at lanes [0:clip), reward hidden at [clip:clip+H2)
        wp = wp.at[off3:off3 + H, 0:self.clip].set(self.sw3)
        wp = wp.at[off3 + H:off3 + 2 * H, self.clip:self.clip + H2].set(self.rw3)
        w_packed = wp.astype(jnp.bfloat16)

        ra_rows = _round_up(4 + reward_dim, 8)
        ax = jnp.zeros((ra_rows, lpad), jnp.float32)
        ax = ax.at[0, 0:H].set(self.sb1).at[0, H:2 * H].set(self.rb1)
        ax = ax.at[1, 0:H].set(self.sb2).at[1, H:2 * H].set(self.rb2)
        ax = ax.at[2, 0:self.clip].set(self.sb3).at[2, self.clip:self.clip + H2].set(self.rb3)
        ax = ax.at[3, self.clip:self.clip + reward_dim].set(self.rb4)
        ax = ax.at[4:4 + reward_dim, self.clip:self.clip + H2].set(self.rw4.T)
        aux = ax

        kernel = functools.partial(
            _decoder_mdp_kernel,
            clip=self.clip, reward_dim=reward_dim,
            k1=k1, k1pad=k1pad, off2=off2, off3=off3)

        out_w_pad = _round_up(self.clip + reward_dim, 128)   # lane-dense output width
        clip_ = self.clip
        rd = reward_dim

        def forward(state, action, z):
            b = state.shape[0]
            tb = min(_round_up(b, 8), 128)        # batch tile (grid axis -> "parallel")
            bp = _round_up(b, tb)
            if bp != b:
                pad = ((0, bp - b), (0, 0))
                state = jnp.pad(state, pad)
                action = jnp.pad(action, pad)
                z = jnp.pad(z, pad)
            grid = (bp // tb,)

            flops = 2 * bp * lpad * (k1pad + 2 * lpad + rd)
            bytes_accessed = (state.size * state.dtype.itemsize
                              + action.size * action.dtype.itemsize
                              + z.size * z.dtype.itemsize
                              + 2 * w_packed.size + 4 * aux.size
                              + 4 * bp * out_w_pad)

            out = pl.pallas_call(
                kernel,
                out_shape=jax.ShapeDtypeStruct((bp, out_w_pad), jnp.float32),
                grid_spec=pltpu.PrefetchScalarGridSpec(
                    num_scalar_prefetch=0,
                    grid=grid,
                    in_specs=[
                        pl.BlockSpec((tb, state.shape[1]), lambda i: (i, 0)),
                        pl.BlockSpec((tb, action.shape[1]), lambda i: (i, 0)),
                        pl.BlockSpec((tb, z.shape[1]), lambda i: (i, 0)),
                        # constant index_map -> weights/biases DMA'd once, stay VMEM-resident
                        pl.BlockSpec((rw_rows, lpad), lambda i: (0, 0)),
                        pl.BlockSpec((ra_rows, lpad), lambda i: (0, 0)),
                    ],
                    out_specs=pl.BlockSpec((tb, out_w_pad), lambda i: (i, 0)),
                    scratch_shapes=[pltpu.VMEM((tb, k1pad), jnp.float32)],
                ),
                compiler_params=pltpu.CompilerParams(
                    dimension_semantics=("parallel",)),
                cost_estimate=pl.CostEstimate(
                    flops=flops, transcendentals=0,
                    bytes_accessed=bytes_accessed),
            )(state, action, z, w_packed, aux)
            return out[:b, 0:clip_], out[:b, clip_:clip_ + rd]

        self._forward = jax.jit(forward)

    def __call__(self, state, action, next_state, z):
        # next_state is unused in the reference forward (kept for signature parity).
        del next_state
        return self._forward(state, action, z)

    # Pure-JAX reference mimicking the kernel's numerics (bf16 matmul operands,
    # f32 accumulation / bias / ReLU; reward output layer in f32).
    def reference(self, state, action, next_state, z):
        del next_state
        x = jnp.concatenate([state, action, z], axis=-1).astype(jnp.float32)

        def mm(lhs, w):
            return jnp.dot(lhs.astype(jnp.bfloat16), w.astype(jnp.bfloat16),
                           preferred_element_type=jnp.float32)

        h = jnp.maximum(mm(x, self.sw1) + self.sb1, 0.0)
        h = jnp.maximum(mm(h, self.sw2) + self.sb2, 0.0)
        s_est = mm(h, self.sw3) + self.sb3

        g = jnp.maximum(mm(x, self.rw1) + self.rb1, 0.0)
        g = jnp.maximum(mm(g, self.rw2) + self.rb2, 0.0)
        g = jnp.maximum(mm(g, self.rw3) + self.rb3, 0.0)
        r_est = jnp.dot(g, self.rw4, preferred_element_type=jnp.float32) + self.rb4
        return s_est, r_est

    # Full-f32 reference matching the original PyTorch module's numerics.
    def reference_f32(self, state, action, next_state, z):
        del next_state
        x = jnp.concatenate([state, action, z], axis=-1).astype(jnp.float32)
        h = jnp.maximum(x @ self.sw1 + self.sb1, 0.0)
        h = jnp.maximum(h @ self.sw2 + self.sb2, 0.0)
        s_est = h @ self.sw3 + self.sb3
        g = jnp.maximum(x @ self.rw1 + self.rb1, 0.0)
        g = jnp.maximum(g @ self.rw2 + self.rb2, 0.0)
        g = jnp.maximum(g @ self.rw3 + self.rb3, 0.0)
        r_est = g @ self.rw4 + self.rb4
        return s_est, r_est


if __name__ == "__main__":
    key = jax.random.PRNGKey(0)
    k_param, k_s, k_a, k_ns, k_z = jax.random.split(key, 5)

    # Small, module-consistent shapes.
    batch = 8
    state_dim = 16
    action_dim = 8
    z_dim = 8
    reward_dim = 1
    net_complex = 2.0
    state_reconstruction_clip = None   # -> clip = state_dim

    model = DecoderMDPPallas(action_dim, state_dim, reward_dim, z_dim,
                             net_complex, state_reconstruction_clip, k_param)

    state = jax.random.normal(k_s, (batch, state_dim), jnp.float32)
    action = jax.random.normal(k_a, (batch, action_dim), jnp.float32)
    next_state = jax.random.normal(k_ns, (batch, state_dim), jnp.float32)
    z = jax.random.normal(k_z, (batch, z_dim), jnp.float32)

    state_est, reward_est = model(state, action, next_state, z)
    jax.block_until_ready((state_est, reward_est))

    assert state_est.shape == (batch, state_dim)
    assert reward_est.shape == (batch, reward_dim)

    # tight check vs a bf16-matched JAX reference
    s_ref, r_ref = model.reference(state, action, next_state, z)
    assert jnp.allclose(state_est, s_ref, atol=5e-3, rtol=5e-3)
    assert jnp.allclose(reward_est, r_ref, atol=5e-3, rtol=5e-3)

    # loose check vs the original full-f32 semantics (bf16 MXU operand drift only)
    s32, r32 = model.reference_f32(state, action, next_state, z)
    assert jnp.allclose(state_est, s32, atol=5e-2, rtol=5e-2)
    assert jnp.allclose(reward_est, r32, atol=5e-2, rtol=5e-2)

    print("KERNEL_OK")
</pallas_src>

<mosaic_0001>
module attributes {stable_mosaic.version = 11 : i64} {
  func.func @_decoder_mdp_kernel(%arg0: i32, %arg1: memref<8x16xf32, #tpu.memory_space<vmem>>, %arg2: memref<8x8xf32, #tpu.memory_space<vmem>>, %arg3: memref<8x8xf32, #tpu.memory_space<vmem>>, %arg4: memref<288x128xbf16, #tpu.memory_space<vmem>>, %arg5: memref<8x128xf32, #tpu.memory_space<vmem>>, %arg6: memref<8x128xf32, #tpu.memory_space<vmem>>, %arg7: memref<8x32xf32, #tpu.memory_space<vmem>>) attributes {dimension_semantics = [#tpu.dimension_semantics<parallel>], iteration_bounds = array<i64: 1>, scalar_prefetch = 0 : i64, scratch_operands = 1 : i64, tpu.core_type = #tpu.core_type<tc>, window_params = [{transform_indices = @transform_0, window_bounds = array<i64: 8, 16>}, {transform_indices = @transform_1, window_bounds = array<i64: 8, 8>}, {transform_indices = @transform_2, window_bounds = array<i64: 8, 8>}, {pipeline_mode = #tpu.pipeline_mode<synchronous>, transform_indices = @transform_3, window_bounds = array<i64: 288, 128>}, {pipeline_mode = #tpu.pipeline_mode<synchronous>, transform_indices = @transform_4, window_bounds = array<i64: 8, 128>}, {transform_indices = @transform_5, window_bounds = array<i64: 8, 128>}]} {
    %c0 = arith.constant 0 : index
    %c0_0 = arith.constant 0 : index
    %0 = vector.load %arg1[%c0, %c0_0] : memref<8x16xf32, #tpu.memory_space<vmem>>, vector<8x16xf32>
    %c0_1 = arith.constant 0 : index
    %c0_2 = arith.constant 0 : index
    %1 = vector.load %arg7[%c0_1, %c0_2] : memref<8x32xf32, #tpu.memory_space<vmem>>, vector<8x16xf32>
    tpu.vector_store %arg7[%c0_1, %c0_2], %0 {strides = array<i32>} : memref<8x32xf32, #tpu.memory_space<vmem>>, vector<8x16xf32>,
    %c0_3 = arith.constant 0 : index
    %c0_4 = arith.constant 0 : index
    %2 = vector.load %arg2[%c0_3, %c0_4] : memref<8x8xf32, #tpu.memory_space<vmem>>, vector<8x8xf32>
    %c0_5 = arith.constant 0 : index
    %c16 = arith.constant 16 : index
    %3 = vector.load %arg7[%c0_5, %c16] : memref<8x32xf32, #tpu.memory_space<vmem>>, vector<8x8xf32>
    tpu.vector_store %arg7[%c0_5, %c16], %2 {strides = array<i32>} : memref<8x32xf32, #tpu.memory_space<vmem>>, vector<8x8xf32>,
    %c0_6 = arith.constant 0 : index
    %c0_7 = arith.constant 0 : index
    %4 = vector.load %arg3[%c0_6, %c0_7] : memref<8x8xf32, #tpu.memory_space<vmem>>, vector<8x8xf32>
    %c0_8 = arith.constant 0 : index
    %c24 = arith.constant 24 : index
    %5 = vector.load %arg7[%c0_8, %c24] : memref<8x32xf32, #tpu.memory_space<vmem>>, vector<8x8xf32>
    tpu.vector_store %arg7[%c0_8, %c24], %4 {strides = array<i32>} : memref<8x32xf32, #tpu.memory_space<vmem>>, vector<8x8xf32>,
    %c0_9 = arith.constant 0 : index
    %c0_10 = arith.constant 0 : index
    %6 = vector.load %arg7[%c0_9, %c0_10] : memref<8x32xf32, #tpu.memory_space<vmem>>, vector<8x32xf32>
    %7 = arith.truncf %6 : vector<8x32xf32> to vector<8x32xbf16>
    %c0_11 = arith.constant 0 : index
    %c0_12 = arith.constant 0 : index
    %8 = vector.load %arg4[%c0_11, %c0_12] : memref<288x128xbf16, #tpu.memory_space<vmem>>, vector<32x128xbf16>
    %cst = arith.constant dense<0.000000e+00> : vector<8x128xf32>
    %9 = tpu.matmul %7, %8, %cst {dimension_numbers = #tpu.dot_dimension_numbers<[1], [0], [0], [1], [0, 0, 1, 1], [], []>} : vector<8x32xbf16>, vector<32x128xbf16>, vector<8x128xf32> -> vector<8x128xf32>
    %c0_13 = arith.constant 0 : index
    %c0_14 = arith.constant 0 : index
    %10 = vector.load %arg5[%c0_13, %c0_14] : memref<8x128xf32, #tpu.memory_space<vmem>>, vector<1x128xf32>
    %11 = vector.broadcast %10 : vector<1x128xf32> to vector<8x128xf32>
    %12 = arith.addf %9, %11 : vector<8x128xf32>
    %cst_15 = arith.constant 0.000000e+00 : f32
    %13 = vector.broadcast %cst_15 : f32 to vector<8x128xf32>
    %14 = arith.maximumf %12, %13 : vector<8x128xf32>
    %15 = arith.truncf %14 : vector<8x128xf32> to vector<8x128xbf16>
    %c32 = arith.constant 32 : index
    %c0_16 = arith.constant 0 : index
    %16 = vector.load %arg4[%c32, %c0_16] : memref<288x128xbf16, #tpu.memory_space<vmem>>, vector<128x128xbf16>
    %cst_17 = arith.constant dense<0.000000e+00> : vector<8x128xf32>
    %17 = tpu.matmul %15, %16, %cst_17 {dimension_numbers = #tpu.dot_dimension_numbers<[1], [0], [0], [1], [0, 0, 1, 1], [], []>} : vector<8x128xbf16>, vector<128x128xbf16>, vector<8x128xf32> -> vector<8x128xf32>
    %c1 = arith.constant 1 : index
    %c0_18 = arith.constant 0 : index
    %18 = vector.load %arg5[%c1, %c0_18] : memref<8x128xf32, #tpu.memory_space<vmem>>, vector<1x128xf32>
    %19 = vector.broadcast %18 : vector<1x128xf32> to vector<8x128xf32>
    %20 = arith.addf %17, %19 : vector<8x128xf32>
    %cst_19 = arith.constant 0.000000e+00 : f32
    %21 = vector.broadcast %cst_19 : f32 to vector<8x128xf32>
    %22 = arith.maximumf %20, %21 : vector<8x128xf32>
    %23 = arith.truncf %22 : vector<8x128xf32> to vector<8x128xbf16>
    %c160 = arith.constant 160 : index
    %c0_20 = arith.constant 0 : index
    %24 = vector.load %arg4[%c160, %c0_20] : memref<288x128xbf16, #tpu.memory_space<vmem>>, vector<128x128xbf16>
    %cst_21 = arith.constant dense<0.000000e+00> : vector<8x128xf32>
    %25 = tpu.matmul %23, %24, %cst_21 {dimension_numbers = #tpu.dot_dimension_numbers<[1], [0], [0], [1], [0, 0, 1, 1], [], []>} : vector<8x128xbf16>, vector<128x128xbf16>, vector<8x128xf32> -> vector<8x128xf32>
    %c2 = arith.constant 2 : index
    %c0_22 = arith.constant 0 : index
    %26 = vector.load %arg5[%c2, %c0_22] : memref<8x128xf32, #tpu.memory_space<vmem>>, vector<1x128xf32>
    %27 = vector.broadcast %26 : vector<1x128xf32> to vector<8x128xf32>
    %28 = arith.addf %25, %27 : vector<8x128xf32>
    %cst_23 = arith.constant 0.000000e+00 : f32
    %29 = vector.broadcast %cst_23 : f32 to vector<8x128xf32>
    %30 = arith.maximumf %28, %29 : vector<8x128xf32>
    %31 = tpu.iota {dimensions = array<i32: 1>} : vector<8x128xi32>
    %c16_i32 = arith.constant 16 : i32
    %32 = vector.broadcast %c16_i32 : i32 to vector<8x128xi32>
    %33 = arith.cmpi slt, %31, %32 : vector<8x128xi32>
    %cst_24 = arith.constant 0.000000e+00 : f32
    %34 = vector.broadcast %cst_24 : f32 to vector<8x128xf32>
    %35 = arith.select %33, %28, %34 : vector<8x128xi1>, vector<8x128xf32>
    %c4 = arith.constant 4 : index
    %c0_25 = arith.constant 0 : index
    %36 = vector.load %arg5[%c4, %c0_25] : memref<8x128xf32, #tpu.memory_space<vmem>>, vector<1x128xf32>
    %37 = vector.broadcast %36 : vector<1x128xf32> to vector<8x128xf32>
    %38 = arith.mulf %30, %37 : vector<8x128xf32>
    %cst_26 = arith.constant dense<0.000000e+00> : vector<8xf32>
    %39 = vector.multi_reduction <add>, %38, %cst_26 [1] : vector<8x128xf32> to vector<8xf32>
    %40 = vector.shape_cast %39 : vector<8xf32> to vector<8x1xf32>
    %c16_i32_27 = arith.constant 16 : i32
    %41 = vector.broadcast %c16_i32_27 : i32 to vector<8x128xi32>
    %42 = arith.cmpi eq, %31, %41 : vector<8x128xi32>
    %43 = vector.shape_cast %40 : vector<8x1xf32> to vector<8x1xf32>
    %44 = vector.broadcast %43 : vector<8x1xf32> to vector<8x128xf32>
    %45 = arith.select %42, %44, %35 : vector<8x128xi1>, vector<8x128xf32>
    %c3 = arith.constant 3 : index
    %c0_28 = arith.constant 0 : index
    %46 = vector.load %arg5[%c3, %c0_28] : memref<8x128xf32, #tpu.memory_space<vmem>>, vector<1x128xf32>
    %47 = vector.broadcast %46 : vector<1x128xf32> to vector<8x128xf32>
    %48 = arith.addf %45, %47 : vector<8x128xf32>
    %c0_29 = arith.constant 0 : index
    %c0_30 = arith.constant 0 : index
    %49 = vector.load %arg6[%c0_29, %c0_30] : memref<8x128xf32, #tpu.memory_space<vmem>>, vector<8x128xf32>
    tpu.vector_store %arg6[%c0_29, %c0_30], %48 {strides = array<i32>} : memref<8x128xf32, #tpu.memory_space<vmem>>, vector<8x128xf32>,
    return
  }
  func.func @transform_0(%arg0: i32) -> (i32, i32) {
    %c0_i32 = arith.constant 0 : i32
    %c0_i32_0 = arith.constant 0 : i32
    return %arg0, %c0_i32 : i32, i32
  }
  func.func @transform_1(%arg0: i32) -> (i32, i32) {
    %c0_i32 = arith.constant 0 : i32
    %c0_i32_0 = arith.constant 0 : i32
    return %arg0, %c0_i32 : i32, i32
  }
  func.func @transform_2(%arg0: i32) -> (i32, i32) {
    %c0_i32 = arith.constant 0 : i32
    %c0_i32_0 = arith.constant 0 : i32
    return %arg0, %c0_i32 : i32, i32
  }
  func.func @transform_3(%arg0: i32) -> (i32, i32) {
    %c0_i32 = arith.constant 0 : i32
    %c0_i32_0 = arith.constant 0 : i32
    %c0_i32_1 = arith.constant 0 : i32
    return %c0_i32, %c0_i32_0 : i32, i32
  }
  func.func @transform_4(%arg0: i32) -> (i32, i32) {
    %c0_i32 = arith.constant 0 : i32
    %c0_i32_0 = arith.constant 0 : i32
    %c0_i32_1 = arith.constant 0 : i32
    return %c0_i32, %c0_i32_0 : i32, i32
  }
  func.func @transform_5(%arg0: i32) -> (i32, i32) {
    %c0_i32 = arith.constant 0 : i32
    %c0_i32_0 = arith.constant 0 : i32
    return %arg0, %c0_i32 : i32, i32
  }
}

</mosaic_0001>

<llo_original>
// kernel: forward.1
$region0: #{forward.1}
  #allocation0 [shape = 'u32[]', space=smem, size = 0x4, offset = 0x4, fixed_abs, tag = 'smem constant byte address 0x4 - core index']
  #allocation1 [shape = 'u32[144,128]{1,0:T(1,128)}', space=vmem, size = 0x12000, scoped, tag = 'internal scratch']
  #allocation2 [shape = 'f32[8,32]{1,0:T(8,128)}', space=vmem, size = 0x1000, scoped, tag = 'scratch operand']
  %s0 = inlined_call_operand.hbm [shape: f32[8,16], index: 0, kind: input, shape index: {}]
  %s1 = inlined_call_operand.hbm [shape: f32[8,8], index: 1, kind: input, shape index: {}]
  %s2 = inlined_call_operand.hbm [shape: f32[8,8], index: 2, kind: input, shape index: {}]
  %s3 = inlined_call_operand.hbm [shape: bf16[288,128], index: 3, kind: input, shape index: {}]
  %s4 = inlined_call_operand.hbm [shape: f32[8,128], index: 4, kind: input, shape index: {}]
  %s5 = inlined_call_operand.vmem [shape: f32[8,128], index: 5, kind: output, shape index: {}]
  %s6 = sld [smem:[#allocation0]]
  $region50: #{forward.1} parent=0
    _
  %s8 = ssub.s32 1, %s6
  %s9 = scalar_select 0, %s8, %s6
  $region1: #{forward.1} parent=0
    #allocation3 [shape = 'u8[4096]{0}', space=vmem, size = 0x1000, scoped, tag = 'input window, operand 0, single buffered']
    #allocation4 [shape = 's32[1]{0}', space=sflag, size = 0x4, scoped, tag = 'scoped memory for forward.1']
    #allocation5 [shape = 'u8[4096]{0}', space=vmem, size = 0x1000, scoped, tag = 'input window, operand 1, single buffered']
    #allocation6 [shape = 's32[1]{0}', space=sflag, size = 0x4, scoped, tag = 'scoped memory for forward.1']
    #allocation7 [shape = 'u8[4096]{0}', space=vmem, size = 0x1000, scoped, tag = 'input window, operand 2, single buffered']
    #allocation8 [shape = 'u8[73728]{0}', space=vmem, size = 0x12000, scoped, tag = 'input window, operand 3, single buffered']
    #allocation9 [shape = 's32[1]{0}', space=sflag, size = 0x4, scoped, tag = 'scoped memory for forward.1']
    #allocation10 [shape = 'u8[4096]{0}', space=vmem, size = 0x1000, scoped, tag = 'input window, operand 4, single buffered']
    %10 = vsyncpa [#allocation4], 0
    %11 = vsyncpa [#allocation6], 0
    %12 = vsyncpa [#allocation9], 0
    // Predicated region
    $region2: #{forward.1} parent=1 // pred_check
      _
    $region3: #{forward.1} parent=1 // pred_check_branch
      %14 = sbr.rel (0) target = $region5
    $region4: #{forward.1} parent=1 // pred_region
      %s16 = ssub.s32 128, 128
      %17 = vsyncadd [#allocation4], %s16
      %s19 = sshll.u32 [#allocation3], 4
      %s20 = int_to_ptr.vmem [resolvable:$true] %s19
      %22 = dma.hbm_to_vmem [thread:$0]  %s0, 128, %s20, [#allocation4]
    $region5: #{forward.1} parent=1 // pred_fallthru
      _
    // Predicated region
    $region6: #{forward.1} parent=1 // pred_check
      _
    $region7: #{forward.1} parent=1 // pred_check_branch
      %24 = sbr.rel (0) target = $region9
    $region8: #{forward.1} parent=1 // pred_region
      %s26 = ssub.s32 128, 128
      %27 = vsyncadd [#allocation6], %s26
      %s29 = sshll.u32 [#allocation5], 4
      %s30 = int_to_ptr.vmem [resolvable:$true] %s29
      %32 = dma.hbm_to_vmem [thread:$0]  %s1, 128, %s30, [#allocation6]
    $region9: #{forward.1} parent=1 // pred_fallthru
      _
    // Predicated region
    $region10: #{forward.1} parent=1 // pred_check
      _
    $region11: #{forward.1} parent=1 // pred_check_branch
      %34 = sbr.rel (0) target = $region13
    $region12: #{forward.1} parent=1 // pred_region
      %s36 = ssub.s32 128, 128
      %37 = vsyncadd [#allocation6], %s36
      %s39 = sshll.u32 [#allocation7], 4
      %s40 = int_to_ptr.vmem [resolvable:$true] %s39
      %42 = dma.hbm_to_vmem [thread:$0]  %s2, 128, %s40, [#allocation6]
    $region13: #{forward.1} parent=1 // pred_fallthru
      _
    // Predicated region
    $region14: #{forward.1} parent=1 // pred_check
      _
    $region15: #{forward.1} parent=1 // pred_check_branch
      %44 = sbr.rel (0) target = $region17
    $region16: #{forward.1} parent=1 // pred_region
      %s46 = ssub.s32 2304, 2304
      %47 = vsyncadd [#allocation9], %s46
      %s48 = sshll.u32 [#allocation8], 4
      %s49 = int_to_ptr.vmem [resolvable:$true] %s48
      %54 = dma.hbm_to_vmem [thread:$0]  %s3, 2304, %s49, [#allocation9], 64, 64, 4
    $region17: #{forward.1} parent=1 // pred_fallthru
      _
    // Predicated region
    $region18: #{forward.1} parent=1 // pred_check
      _
    $region19: #{forward.1} parent=1 // pred_check_branch
      %56 = sbr.rel (0) target = $region21
    $region20: #{forward.1} parent=1 // pred_region
      %s58 = ssub.s32 128, 128
      %59 = vsyncadd [#allocation9], %s58
      %s61 = sshll.u32 [#allocation10], 4
      %s62 = int_to_ptr.vmem [resolvable:$true] %s61
      %64 = dma.hbm_to_vmem [thread:$0]  %s4, 128, %s62, [#allocation9]
    $region21: #{forward.1} parent=1 // pred_fallthru
      _
    // Predicated region
    $region22: #{forward.1} parent=1 // pred_check
      _
    $region23: #{forward.1} parent=1 // pred_check_branch
      %66 = sbr.rel (0) target = $region25
    $region24: #{forward.1} parent=1 // pred_region
      %67 = dma.done [#allocation4], 128
    $region25: #{forward.1} parent=1 // pred_fallthru
      _
    // Predicated region
    $region26: #{forward.1} parent=1 // pred_check
      _
    $region27: #{forward.1} parent=1 // pred_check_branch
      %69 = sbr.rel (0) target = $region29
    $region28: #{forward.1} parent=1 // pred_region
      %70 = dma.done [#allocation6], 128
    $region29: #{forward.1} parent=1 // pred_fallthru
      _
    // Predicated region
    $region30: #{forward.1} parent=1 // pred_check
      _
    $region31: #{forward.1} parent=1 // pred_check_branch
      %72 = sbr.rel (0) target = $region33
    $region32: #{forward.1} parent=1 // pred_region
      %73 = dma.done [#allocation6], 128
    $region33: #{forward.1} parent=1 // pred_fallthru
      _
    // Predicated region
    $region34: #{forward.1} parent=1 // pred_check
      _
    $region35: #{forward.1} parent=1 // pred_check_branch
      %75 = sbr.rel (0) target = $region37
    $region36: #{forward.1} parent=1 // pred_region
      %76 = dma.done [#allocation9], 2304
    $region37: #{forward.1} parent=1 // pred_fallthru
      _
    // Predicated region
    $region38: #{forward.1} parent=1 // pred_check
      _
    $region39: #{forward.1} parent=1 // pred_check_branch
      %78 = sbr.rel (0) target = $region41
    $region40: #{forward.1} parent=1 // pred_region
      %79 = dma.done [#allocation9], 128
    $region41: #{forward.1} parent=1 // pred_fallthru
      _
    %v81 = vld [vmem:[#allocation3] sm:$0xff]
    %vm82 = vcmask 130048
    %83 = vst.msk [vmem:[#allocation2] sm:$0xff] %vm82, %v81
    %v84 = vld [vmem:[#allocation5] sm:$0xff]
    %86 = vrot.lane.b32.xlu0 %v84, 16
    %v87 = vpop.permute.xlu0 %86
    %vm89 = vcmask 195712
    %90 = vst.msk [vmem:[#allocation2] sm:$0xff] %vm89, %v87
    %v91 = vld [vmem:[#allocation7] sm:$0xff]
    %93 = vrot.lane.b32.xlu0 %v91, 24
    %v94 = vpop.permute.xlu0 %93
    %vm96 = vcmask 261312
    %97 = vst.msk [vmem:[#allocation2] sm:$0xff] %vm96, %v94
    %v98 = vld [vmem:[#allocation2] sm:$0xff]
    %v99 = vpack.c.bf16 %v98, %v98
    %v100 = vld [vmem:[#allocation8] sm:$0xf]
    %v101 = vld [vmem:[#allocation8 + $0x4] sm:$0xf]
    %v102 = vld [vmem:[#allocation8 + $0x8] sm:$0xf]
    %v103 = vld [vmem:[#allocation8 + $0xc] sm:$0xf]
    %v104 = vld [vmem:[#allocation10] sm:$0x1]
    %v105 = vlaneseq
    %v106 = vshrl.u32 %v105, 7
    %v107 = vsub.s32 0, %v106
    %v108 = vrot.slane %v104, %v107
    %v113 = vunpack.c.l.b16 %v100
    %v114 = vunpack.c.l.b16 %v101
    %v115 = vunpack.c.l.b16 %v102
    %v116 = vunpack.c.l.b16 %v103
    %v117 = vpack.c.b16 %v114, %v113
    %v118 = vpack.c.b16 %v116, %v115
    %vm121 = vcmask 261120
    %v123 = vsel %vm121, %v99, 0
    %125 = vmatprep.subr.bf16.mxu0 0
    %126 = vmatpush1.bf16.msra.mxu0 0
    %127 = vmatprep.subr.bf16.mxu0 0
    %128 = vmatpush1.bf16.msra.mxu0 0
    %129 = vmatprep.subr.bf16.mxu0 0
    %130 = vmatpush1.bf16.msra.mxu0 0
    %131 = vmatprep.subr.bf16.mxu0 0
    %132 = vmatpush1.bf16.msra.mxu0 0
    %133 = vmatprep.subr.bf16.mxu0 0
    %134 = vmatpush1.bf16.msra.mxu0 0
    %135 = vmatprep.subr.bf16.mxu0 0
    %136 = vmatpush1.bf16.msra.mxu0 0
    %137 = vmatprep.subr.bf16.mxu0 0
    %138 = vmatpush1.bf16.msra.mxu0 %v118
    %139 = vmatprep.subr.bf16.mxu0 0
    %140 = vmatpush1.bf16.msra.mxu0 %v117
    %141 = vmatprep.subr.bf16.mxu0 0
    %142 = vmatpush2.bf16.msra.mxu0 0
    %143 = vmatprep.subr.bf16.mxu0 0
    %144 = vmatpush2.bf16.msra.mxu0 0
    %145 = vmatprep.subr.bf16.mxu0 0
    %146 = vmatpush2.bf16.msra.mxu0 0
    %147 = vmatprep.subr.bf16.mxu0 0
    %148 = vmatpush2.bf16.msra.mxu0 0
    %149 = vmatprep.subr.bf16.mxu0 0
    %150 = vmatpush2.bf16.msra.mxu0 0
    %151 = vmatprep.subr.bf16.mxu0 0
    %152 = vmatpush2.bf16.msra.mxu0 0
    %153 = vmatprep.subr.bf16.mxu0 0
    %154 = vmatpush2.bf16.msra.mxu0 0
    %155 = vmatprep.subr.bf16.mxu0 0
    %156 = vmatpush2.bf16.msra.mxu0 0
    %157 = vmatprep.mubr.bf16.mxu0 0
    %158 = vmatmul.mubr.bf16.gmra.mxu0 %v123
    %v159 = vpop.f32.mrf.mxu0
    %v160 = vadd.f32 %v108, %v159
    %v161 = vpop.f32.mrf.mxu0
    %v162 = vpop.f32.mrf.mxu0
    %v163 = vpop.f32.mrf.mxu0
    %164 = vdwg.mxu0
    %v165 = vmax.f32 %v160, 0.0
    %v166 = vpack.c.bf16 %v165, %v165
    %v167 = vld [vmem:[#allocation8 + $0x10] sm:$0xf]
    %v168 = vld [vmem:[#allocation8 + $0x14] sm:$0xf]
    %v169 = vld [vmem:[#allocation8 + $0x18] sm:$0xf]
    %v170 = vld [vmem:[#allocation8 + $0x1c] sm:$0xf]
    %v171 = vld [vmem:[#allocation8 + $0x20] sm:$0xf]
    %v172 = vld [vmem:[#allocation8 + $0x24] sm:$0xf]
    %v173 = vld [vmem:[#allocation8 + $0x28] sm:$0xf]
    %v174 = vld [vmem:[#allocation8 + $0x2c] sm:$0xf]
    %v175 = vld [vmem:[#allocation8 + $0x30] sm:$0xf]
    %v176 = vld [vmem:[#allocation8 + $0x34] sm:$0xf]
    %v177 = vld [vmem:[#allocation8 + $0x38] sm:$0xf]
    %v178 = vld [vmem:[#allocation8 + $0x3c] sm:$0xf]
    %v179 = vld [vmem:[#allocation8 + $0x40] sm:$0xf]
    %v180 = vld [vmem:[#allocation8 + $0x44] sm:$0xf]
    %v181 = vld [vmem:[#allocation8 + $0x48] sm:$0xf]
    %v182 = vld [vmem:[#allocation8 + $0x4c] sm:$0xf]
    %v183 = vld [vmem:[#allocation10 + $0x1] sm:$0x1]
    %v184 = vlaneseq
    %v185 = vshrl.u32 %v184, 7
    %v186 = vsub.s32 0, %v185
    %v187 = vrot.slane %v183, %v186
    %v204 = vunpack.c.l.b16 %v167
    %v205 = vunpack.c.l.b16 %v168
    %v206 = vunpack.c.l.b16 %v169
    %v207 = vunpack.c.l.b16 %v170
    %v208 = vunpack.c.l.b16 %v171
    %v209 = vunpack.c.l.b16 %v172
    %v210 = vunpack.c.l.b16 %v173
    %v211 = vunpack.c.l.b16 %v174
    %v212 = vunpack.c.l.b16 %v175
    %v213 = vunpack.c.l.b16 %v176
    %v214 = vunpack.c.l.b16 %v177
    %v215 = vunpack.c.l.b16 %v178
    %v216 = vunpack.c.l.b16 %v179
    %v217 = vunpack.c.l.b16 %v180
    %v218 = vunpack.c.l.b16 %v181
    %v219 = vunpack.c.l.b16 %v182
    %v220 = vpack.c.b16 %v205, %v204
    %v221 = vpack.c.b16 %v207, %v206
    %v222 = vpack.c.b16 %v209, %v208
    %v223 = vpack.c.b16 %v211, %v210
    %v224 = vpack.c.b16 %v213, %v212
    %v225 = vpack.c.b16 %v215, %v214
    %v226 = vpack.c.b16 %v217, %v216
    %v227 = vpack.c.b16 %v219, %v218
    %236 = vmatprep.subr.bf16.mxu0 0
    %237 = vmatpush1.bf16.msra.mxu0 %v227
    %238 = vmatprep.subr.bf16.mxu0 0
    %239 = vmatpush1.bf16.msra.mxu0 %v226
    %240 = vmatprep.subr.bf16.mxu0 0
    %241 = vmatpush1.bf16.msra.mxu0 %v225
    %242 = vmatprep.subr.bf16.mxu0 0
    %243 = vmatpush1.bf16.msra.mxu0 %v224
    %244 = vmatprep.subr.bf16.mxu0 0
    %245 = vmatpush1.bf16.msra.mxu0 %v223
    %246 = vmatprep.subr.bf16.mxu0 0
    %247 = vmatpush1.bf16.msra.mxu0 %v222
    %248 = vmatprep.subr.bf16.mxu0 0
    %249 = vmatpush1.bf16.msra.mxu0 %v221
    %250 = vmatprep.subr.bf16.mxu0 0
    %251 = vmatpush1.bf16.msra.mxu0 %v220
    %252 = vmatprep.subr.bf16.mxu0 0
    %253 = vmatpush2.bf16.msra.mxu0 0
    %254 = vmatprep.subr.bf16.mxu0 0
    %255 = vmatpush2.bf16.msra.mxu0 0
    %256 = vmatprep.subr.bf16.mxu0 0
    %257 = vmatpush2.bf16.msra.mxu0 0
    %258 = vmatprep.subr.bf16.mxu0 0
    %259 = vmatpush2.bf16.msra.mxu0 0
    %260 = vmatprep.subr.bf16.mxu0 0
    %261 = vmatpush2.bf16.msra.mxu0 0
    %262 = vmatprep.subr.bf16.mxu0 0
    %263 = vmatpush2.bf16.msra.mxu0 0
    %264 = vmatprep.subr.bf16.mxu0 0
    %265 = vmatpush2.bf16.msra.mxu0 0
    %266 = vmatprep.subr.bf16.mxu0 0
    %267 = vmatpush2.bf16.msra.mxu0 0
    %268 = vmatprep.mubr.bf16.mxu0 0
    %269 = vmatmul.mubr.bf16.gmra.mxu0 %v166
    %v270 = vpop.f32.mrf.mxu0
    %v271 = vadd.f32 %v187, %v270
    %v272 = vpop.f32.mrf.mxu0
    %v273 = vpop.f32.mrf.mxu0
    %v274 = vpop.f32.mrf.mxu0
    %275 = vdwg.mxu0
    %v276 = vmax.f32 %v271, 0.0
    %v277 = vpack.c.bf16 %v276, %v276
    %v278 = vld [vmem:[#allocation8 + $0x50] sm:$0xf]
    %v279 = vld [vmem:[#allocation8 + $0x54] sm:$0xf]
    %v280 = vld [vmem:[#allocation8 + $0x58] sm:$0xf]
    %v281 = vld [vmem:[#allocation8 + $0x5c] sm:$0xf]
    %v282 = vld [vmem:[#allocation8 + $0x60] sm:$0xf]
    %v283 = vld [vmem:[#allocation8 + $0x64] sm:$0xf]
    %v284 = vld [vmem:[#allocation8 + $0x68] sm:$0xf]
    %v285 = vld [vmem:[#allocation8 + $0x6c] sm:$0xf]
    %v286 = vld [vmem:[#allocation8 + $0x70] sm:$0xf]
    %v287 = vld [vmem:[#allocation8 + $0x74] sm:$0xf]
    %v288 = vld [vmem:[#allocation8 + $0x78] sm:$0xf]
    %v289 = vld [vmem:[#allocation8 + $0x7c] sm:$0xf]
    %v290 = vld [vmem:[#allocation8 + $0x80] sm:$0xf]
    %v291 = vld [vmem:[#allocation8 + $0x84] sm:$0xf]
    %v292 = vld [vmem:[#allocation8 + $0x88] sm:$0xf]
    %v293 = vld [vmem:[#allocation8 + $0x8c] sm:$0xf]
    %v294 = vld [vmem:[#allocation10 + $0x2] sm:$0x1]
    %v295 = vlaneseq
    %v296 = vshrl.u32 %v295, 7
    %v297 = vsub.s32 0, %v296
    %v298 = vrot.slane %v294, %v297
    %v315 = vunpack.c.l.b16 %v278
    %v316 = vunpack.c.l.b16 %v279
    %v317 = vunpack.c.l.b16 %v280
    %v318 = vunpack.c.l.b16 %v281
    %v319 = vunpack.c.l.b16 %v282
    %v320 = vunpack.c.l.b16 %v283
    %v321 = vunpack.c.l.b16 %v284
    %v322 = vunpack.c.l.b16 %v285
    %v323 = vunpack.c.l.b16 %v286
    %v324 = vunpack.c.l.b16 %v287
    %v325 = vunpack.c.l.b16 %v288
    %v326 = vunpack.c.l.b16 %v289
    %v327 = vunpack.c.l.b16 %v290
    %v328 = vunpack.c.l.b16 %v291
    %v329 = vunpack.c.l.b16 %v292
    %v330 = vunpack.c.l.b16 %v293
    %v331 = vpack.c.b16 %v316, %v315
    %v332 = vpack.c.b16 %v318, %v317
    %v333 = vpack.c.b16 %v320, %v319
    %v334 = vpack.c.b16 %v322, %v321
    %v335 = vpack.c.b16 %v324, %v323
    %v336 = vpack.c.b16 %v326, %v325
    %v337 = vpack.c.b16 %v328, %v327
    %v338 = vpack.c.b16 %v330, %v329
    %347 = vmatprep.subr.bf16.mxu0 0
    %348 = vmatpush1.bf16.msra.mxu0 %v338
    %349 = vmatprep.subr.bf16.mxu0 0
    %350 = vmatpush1.bf16.msra.mxu0 %v337
    %351 = vmatprep.subr.bf16.mxu0 0
    %352 = vmatpush1.bf16.msra.mxu0 %v336
    %353 = vmatprep.subr.bf16.mxu0 0
    %354 = vmatpush1.bf16.msra.mxu0 %v335
    %355 = vmatprep.subr.bf16.mxu0 0
    %356 = vmatpush1.bf16.msra.mxu0 %v334
    %357 = vmatprep.subr.bf16.mxu0 0
    %358 = vmatpush1.bf16.msra.mxu0 %v333
    %359 = vmatprep.subr.bf16.mxu0 0
    %360 = vmatpush1.bf16.msra.mxu0 %v332
    %361 = vmatprep.subr.bf16.mxu0 0
    %362 = vmatpush1.bf16.msra.mxu0 %v331
    %363 = vmatprep.subr.bf16.mxu0 0
    %364 = vmatpush2.bf16.msra.mxu0 0
    %365 = vmatprep.subr.bf16.mxu0 0
    %366 = vmatpush2.bf16.msra.mxu0 0
    %367 = vmatprep.subr.bf16.mxu0 0
    %368 = vmatpush2.bf16.msra.mxu0 0
    %369 = vmatprep.subr.bf16.mxu0 0
    %370 = vmatpush2.bf16.msra.mxu0 0
    %371 = vmatprep.subr.bf16.mxu0 0
    %372 = vmatpush2.bf16.msra.mxu0 0
    %373 = vmatprep.subr.bf16.mxu0 0
    %374 = vmatpush2.bf16.msra.mxu0 0
    %375 = vmatprep.subr.bf16.mxu0 0
    %376 = vmatpush2.bf16.msra.mxu0 0
    %377 = vmatprep.subr.bf16.mxu0 0
    %378 = vmatpush2.bf16.msra.mxu0 0
    %379 = vmatprep.mubr.bf16.mxu0 0
    %380 = vmatmul.mubr.bf16.gmra.mxu0 %v277
    %v381 = vpop.f32.mrf.mxu0
    %v382 = vadd.f32 %v298, %v381
    %v383 = vpop.f32.mrf.mxu0
    %v384 = vpop.f32.mrf.mxu0
    %v385 = vpop.f32.mrf.mxu0
    %386 = vdwg.mxu0
    %v387 = vmax.f32 %v382, 0.0
    %v388 = vlaneseq
    %v389 = vand.u32 %v388, 127
    %vm390 = vcmp.lt.s32.totalorder %v389, 16
    %v391 = vsel %vm390, %v382, 0.0
    %v392 = vld [vmem:[#allocation10 + $0x4] sm:$0x1]
    %v393 = vlaneseq
    %v394 = vshrl.u32 %v393, 7
    %v395 = vsub.s32 0, %v394
    %v396 = vrot.slane %v392, %v395
    %v397 = vmul.f32 %v387, %v396
    %398 = vadd.xlane.f32.xlu0 %v397
    %v399 = vpop.xlane.xlu0 %398
    %vm400 = vcmp.eq.s32.totalorder %v389, 16
    %v401 = vsel %vm400, %v399, %v391
    %v402 = vld [vmem:[#allocation10 + $0x3] sm:$0x1]
    %v403 = vlaneseq
    %v404 = vshrl.u32 %v403, 7
    %v405 = vsub.s32 0, %v404
    %v406 = vrot.slane %v402, %v405
    %v407 = vadd.f32 %v401, %v406
    %408 = vst [vmem:[%s5] sm:$0xff] %v407
    // Predicated region
    $region42: #{forward.1} parent=1 // pred_check
      _
    $region43: #{forward.1} parent=1 // pred_check_branch
      %410 = sbr.rel (0) target = $region45
    $region44: #{forward.1} parent=1 // pred_region
      _
    $region45: #{forward.1} parent=1 // pred_fallthru
      _
    // Predicated region
    $region46: #{forward.1} parent=1 // pred_check
      _
    $region47: #{forward.1} parent=1 // pred_check_branch
      %412 = sbr.rel (0) target = $region49
    $region48: #{forward.1} parent=1 // pred_region
      _
    $region49: #{forward.1} parent=1 // pred_fallthru
      _
    %413 = vsyncpa [#allocation4], 1
    %414 = vsyncpa [#allocation6], 1
    %415 = vsyncpa [#allocation9], 1

</llo_original>
